<compile_context>
chip_gen: v5e
topology: v5e:2x2
jax: 0.10.0
libtpu: 0.0.40
codegen_flags: <defaults>
</compile_context>

<pallas_src>
import jax
import jax.numpy as jnp
from jax.experimental import pallas as pl
from jax.experimental.pallas import tpu as pltpu


def residual_block_kernel(x_ref, vec_ref, w1_ref, w2_ref, o_ref):
    """One batch tile:  out = fc2(relu(bn2(fc1(relu(bn1(x)))))) + x.

    vec_ref packs per-feature f32 vectors as rows:
      0: s1 (bn1 scale)   1: t1 (bn1 shift)
      2: s2 (bn2 scale)   3: t2 = s2*b1 + bn2 shift   4: b2 (fc2 bias)
    """
    s1 = vec_ref[0:1, :]
    t1 = vec_ref[1:2, :]
    s2 = vec_ref[2:3, :]
    t2 = vec_ref[3:4, :]
    b2 = vec_ref[4:5, :]

    # bn1 + relu (dropout = identity in eval mode)
    h = jnp.maximum(x_ref[...] * s1 + t1, 0.0)

    # fc1 (bf16 MXU inputs, f32 accumulation) + bn2 affine + relu
    h = jnp.dot(h.astype(jnp.bfloat16), w1_ref[...],
                preferred_element_type=jnp.float32) * s2 + t2
    h = jnp.maximum(h, 0.0)

    # fc2 + bias + residual.  Re-read x_ref here instead of keeping the f32 x
    # tile live across both matmuls (frees vregs at large batch tiles).
    o_ref[...] = (jnp.dot(h.astype(jnp.bfloat16), w2_ref[...],
                          preferred_element_type=jnp.float32)
                  + b2 + x_ref[...])


def _round_up8(v):
    return max(8, ((v + 7) // 8) * 8)


def _pick_tile(n, tile_n):
    """Batch-tile size: multiple of 8, big enough to amortize per-step
    overhead, and split mid-sized N into 2 steps for v7x megacore."""
    if n > tile_n:
        return tile_n
    if n >= 512:
        # Split so the grid has >=2 steps (both TensorCores get work on v7x).
        return _round_up8(pl.cdiv(n, 2))
    return _round_up8(n)


def _vmem_cap_bytes():
    try:
        return int(pltpu.get_tpu_info().vmem_capacity_bytes)
    except Exception:
        return 64 << 20  # conservative (v7x per-TC VMEM)


def residual_block(x, params, *, tile_n=1024, eps=1e-5):
    """x: (N, D) float32.  params: dict of deterministic weights (PyTorch layout)."""
    N, D = x.shape
    x = x.astype(jnp.float32)

    # Fold BatchNorm running stats into per-feature scale/shift (f32 on host).
    s1 = params["bn1_gamma"] / jnp.sqrt(params["bn1_var"] + eps)
    t1 = params["bn1_beta"] - params["bn1_mean"] * s1
    s2 = params["bn2_gamma"] / jnp.sqrt(params["bn2_var"] + eps)
    t2 = params["bn2_beta"] - params["bn2_mean"] * s2

    # fc1 bias folded with bn2 shift:  (h @ W1^T + b1)*s2 + t2
    #                               == (h @ W1^T)*s2 + (s2*b1 + t2)
    # s2 stays an f32 multiply inside the kernel (bf16 weight unscaled -> more
    # accurate than folding s2 into the bf16 weight).
    t2f = s2 * params["fc1_b"] + t2
    w1t = params["fc1_w"].T.astype(jnp.bfloat16)     # (D, D) bf16
    w2t = params["fc2_w"].T.astype(jnp.bfloat16)     # (D, D) bf16

    # Pack the per-feature f32 vectors into one (8, D) resident block.
    zero = jnp.zeros((D,), jnp.float32)
    vec = jnp.stack([s1, t1, s2, t2f, params["fc2_b"].astype(jnp.float32),
                     zero, zero, zero], axis=0).astype(jnp.float32)

    t_n = _pick_tile(N, tile_n)
    grid = (pl.cdiv(N, t_n),)     # ragged last block handled by Pallas

    # VMEM budget: double-buffered resident bf16 weights + double-buffered f32
    # x/out tiles + packed vector block, plus headroom for Mosaic scratch.
    weight_bytes = 2 * 2 * D * D * 2          # 2 weights x 2 buffers x bf16
    act_bytes = 2 * 2 * t_n * D * 4           # x + out, 2 buffers each, f32
    vec_bytes = 2 * 8 * D * 4
    vmem_limit = min(int(1.5 * (weight_bytes + act_bytes + vec_bytes)) + (4 << 20),
                     _vmem_cap_bytes())

    tile_spec = pl.BlockSpec((t_n, D), lambda i: (i, 0))

    def resident(shape):
        # Same block index for every grid step -> fetched once, stays in VMEM.
        return pl.BlockSpec(shape, lambda i: (0, 0))

    out = pl.pallas_call(
        residual_block_kernel,
        out_shape=jax.ShapeDtypeStruct((N, D), jnp.float32),
        grid=grid,
        in_specs=[
            tile_spec,            # x            (TILE_N, D) f32
            resident((8, D)),     # packed s1/t1/s2/t2f/b2   f32
            resident((D, D)),     # w1^T         bf16
            resident((D, D)),     # w2^T         bf16
        ],
        out_specs=tile_spec,      # lane-dense: full feature extent
        compiler_params=pltpu.CompilerParams(
            dimension_semantics=("parallel",),
            vmem_limit_bytes=vmem_limit,
        ),
    )(x, vec, w1t, w2t)

    return out


def residual_block_ref(x, params, eps=1e-5):
    """Pure-JAX f32 reference (eval-mode PyTorch semantics)."""
    h = (x - params["bn1_mean"]) / jnp.sqrt(params["bn1_var"] + eps)
    h = h * params["bn1_gamma"] + params["bn1_beta"]
    h = jnp.maximum(h, 0.0)
    h = h @ params["fc1_w"].T + params["fc1_b"]
    h = (h - params["bn2_mean"]) / jnp.sqrt(params["bn2_var"] + eps)
    h = h * params["bn2_gamma"] + params["bn2_beta"]
    h = jnp.maximum(h, 0.0)
    h = h @ params["fc2_w"].T + params["fc2_b"]
    return h + x


def make_params(key, dim):
    ks = jax.random.split(key, 12)
    scale = 1.0 / jnp.sqrt(dim)
    return {
        # BatchNorm1d #1 (deterministic, non-trivial running stats)
        "bn1_gamma": 1.0 + 0.1 * jax.random.normal(ks[0], (dim,), jnp.float32),
        "bn1_beta":  0.1 * jax.random.normal(ks[1], (dim,), jnp.float32),
        "bn1_mean":  0.05 * jax.random.normal(ks[2], (dim,), jnp.float32),
        "bn1_var":   1.0 + 0.1 * jax.random.uniform(ks[3], (dim,), jnp.float32),
        # BatchNorm1d #2
        "bn2_gamma": 1.0 + 0.1 * jax.random.normal(ks[4], (dim,), jnp.float32),
        "bn2_beta":  0.1 * jax.random.normal(ks[5], (dim,), jnp.float32),
        "bn2_mean":  0.05 * jax.random.normal(ks[6], (dim,), jnp.float32),
        "bn2_var":   1.0 + 0.1 * jax.random.uniform(ks[7], (dim,), jnp.float32),
        # Linear layers (weight shape (out, in) as in PyTorch)
        "fc1_w": scale * jax.random.normal(ks[8], (dim, dim), jnp.float32),
        "fc1_b": scale * jax.random.normal(ks[9], (dim,), jnp.float32),
        "fc2_w": scale * jax.random.normal(ks[10], (dim, dim), jnp.float32),
        "fc2_b": scale * jax.random.normal(ks[11], (dim,), jnp.float32),
    }


if __name__ == "__main__":
    key = jax.random.PRNGKey(0)
    kx, kx2, kp = jax.random.split(key, 3)

    dim = 128
    params = make_params(kp, dim)

    # Case 1: small, sublane-aligned batch (single full tile).
    N1 = 8
    x1 = jax.random.normal(kx, (N1, dim), jnp.float32)
    out1 = jax.block_until_ready(residual_block(x1, params))
    ref1 = residual_block_ref(x1, params)
    assert out1.shape == (N1, dim) and out1.dtype == jnp.float32
    # bf16 matmul inputs vs f32 reference -> loosened tolerance.
    assert jnp.allclose(out1, ref1, atol=5e-2, rtol=5e-2), "mismatch vs reference (N=8)"

    # Case 2: non-aligned batch exercises the ragged (masked-write) last block.
    N2 = 20
    x2 = jax.random.normal(kx2, (N2, dim), jnp.float32)
    out2 = jax.block_until_ready(residual_block(x2, params))
    ref2 = residual_block_ref(x2, params)
    assert out2.shape == (N2, dim) and out2.dtype == jnp.float32
    assert jnp.allclose(out2, ref2, atol=5e-2, rtol=5e-2), "mismatch vs reference (N=20)"

    print("KERNEL_OK")
</pallas_src>

<mosaic_0001>
module attributes {stable_mosaic.version = 11 : i64} {
  func.func @residual_block_kernel(%arg0: i32, %arg1: memref<8x128xf32, #tpu.memory_space<vmem>>, %arg2: memref<8x128xf32, #tpu.memory_space<vmem>>, %arg3: memref<128x128xbf16, #tpu.memory_space<vmem>>, %arg4: memref<128x128xbf16, #tpu.memory_space<vmem>>, %arg5: memref<8x128xf32, #tpu.memory_space<vmem>>) attributes {dimension_semantics = [#tpu.dimension_semantics<parallel>], iteration_bounds = array<i64: 1>, scalar_prefetch = 0 : i64, scratch_operands = 0 : i64, tpu.core_type = #tpu.core_type<tc>, window_params = [{transform_indices = @transform_0, window_bounds = array<i64: 8, 128>}, {pipeline_mode = #tpu.pipeline_mode<synchronous>, transform_indices = @transform_1, window_bounds = array<i64: 8, 128>}, {pipeline_mode = #tpu.pipeline_mode<synchronous>, transform_indices = @transform_2, window_bounds = array<i64: 128, 128>}, {pipeline_mode = #tpu.pipeline_mode<synchronous>, transform_indices = @transform_3, window_bounds = array<i64: 128, 128>}, {transform_indices = @transform_4, window_bounds = array<i64: 8, 128>}]} {
    %c0 = arith.constant 0 : index
    %c0_0 = arith.constant 0 : index
    %0 = vector.load %arg2[%c0, %c0_0] : memref<8x128xf32, #tpu.memory_space<vmem>>, vector<1x128xf32>
    %c1 = arith.constant 1 : index
    %c0_1 = arith.constant 0 : index
    %1 = vector.load %arg2[%c1, %c0_1] : memref<8x128xf32, #tpu.memory_space<vmem>>, vector<1x128xf32>
    %c2 = arith.constant 2 : index
    %c0_2 = arith.constant 0 : index
    %2 = vector.load %arg2[%c2, %c0_2] : memref<8x128xf32, #tpu.memory_space<vmem>>, vector<1x128xf32>
    %c3 = arith.constant 3 : index
    %c0_3 = arith.constant 0 : index
    %3 = vector.load %arg2[%c3, %c0_3] : memref<8x128xf32, #tpu.memory_space<vmem>>, vector<1x128xf32>
    %c4 = arith.constant 4 : index
    %c0_4 = arith.constant 0 : index
    %4 = vector.load %arg2[%c4, %c0_4] : memref<8x128xf32, #tpu.memory_space<vmem>>, vector<1x128xf32>
    %c0_5 = arith.constant 0 : index
    %c0_6 = arith.constant 0 : index
    %5 = vector.load %arg1[%c0_5, %c0_6] : memref<8x128xf32, #tpu.memory_space<vmem>>, vector<8x128xf32>
    %6 = vector.broadcast %0 : vector<1x128xf32> to vector<8x128xf32>
    %7 = arith.mulf %5, %6 : vector<8x128xf32>
    %8 = vector.broadcast %1 : vector<1x128xf32> to vector<8x128xf32>
    %9 = arith.addf %7, %8 : vector<8x128xf32>
    %cst = arith.constant 0.000000e+00 : f32
    %10 = vector.broadcast %cst : f32 to vector<8x128xf32>
    %11 = arith.maximumf %9, %10 : vector<8x128xf32>
    %12 = arith.truncf %11 : vector<8x128xf32> to vector<8x128xbf16>
    %c0_7 = arith.constant 0 : index
    %c0_8 = arith.constant 0 : index
    %13 = vector.load %arg3[%c0_7, %c0_8] : memref<128x128xbf16, #tpu.memory_space<vmem>>, vector<128x128xbf16>
    %cst_9 = arith.constant dense<0.000000e+00> : vector<8x128xf32>
    %14 = tpu.matmul %12, %13, %cst_9 {dimension_numbers = #tpu.dot_dimension_numbers<[1], [0], [0], [1], [0, 0, 1, 1], [], []>} : vector<8x128xbf16>, vector<128x128xbf16>, vector<8x128xf32> -> vector<8x128xf32>
    %15 = vector.broadcast %2 : vector<1x128xf32> to vector<8x128xf32>
    %16 = arith.mulf %14, %15 : vector<8x128xf32>
    %17 = vector.broadcast %3 : vector<1x128xf32> to vector<8x128xf32>
    %18 = arith.addf %16, %17 : vector<8x128xf32>
    %cst_10 = arith.constant 0.000000e+00 : f32
    %19 = vector.broadcast %cst_10 : f32 to vector<8x128xf32>
    %20 = arith.maximumf %18, %19 : vector<8x128xf32>
    %21 = arith.truncf %20 : vector<8x128xf32> to vector<8x128xbf16>
    %c0_11 = arith.constant 0 : index
    %c0_12 = arith.constant 0 : index
    %22 = vector.load %arg4[%c0_11, %c0_12] : memref<128x128xbf16, #tpu.memory_space<vmem>>, vector<128x128xbf16>
    %cst_13 = arith.constant dense<0.000000e+00> : vector<8x128xf32>
    %23 = tpu.matmul %21, %22, %cst_13 {dimension_numbers = #tpu.dot_dimension_numbers<[1], [0], [0], [1], [0, 0, 1, 1], [], []>} : vector<8x128xbf16>, vector<128x128xbf16>, vector<8x128xf32> -> vector<8x128xf32>
    %24 = vector.broadcast %4 : vector<1x128xf32> to vector<8x128xf32>
    %25 = arith.addf %23, %24 : vector<8x128xf32>
    %c0_14 = arith.constant 0 : index
    %c0_15 = arith.constant 0 : index
    %26 = vector.load %arg1[%c0_14, %c0_15] : memref<8x128xf32, #tpu.memory_space<vmem>>, vector<8x128xf32>
    %27 = arith.addf %25, %26 : vector<8x128xf32>
    %c0_16 = arith.constant 0 : index
    %c0_17 = arith.constant 0 : index
    %28 = vector.load %arg5[%c0_16, %c0_17] : memref<8x128xf32, #tpu.memory_space<vmem>>, vector<8x128xf32>
    tpu.vector_store %arg5[%c0_16, %c0_17], %27 {strides = array<i32>} : memref<8x128xf32, #tpu.memory_space<vmem>>, vector<8x128xf32>,
    return
  }
  func.func @transform_0(%arg0: i32) -> (i32, i32) {
    %c0_i32 = arith.constant 0 : i32
    %c0_i32_0 = arith.constant 0 : i32
    return %arg0, %c0_i32 : i32, i32
  }
  func.func @transform_1(%arg0: i32) -> (i32, i32) {
    %c0_i32 = arith.constant 0 : i32
    %c0_i32_0 = arith.constant 0 : i32
    %c0_i32_1 = arith.constant 0 : i32
    return %c0_i32, %c0_i32_0 : i32, i32
  }
  func.func @transform_2(%arg0: i32) -> (i32, i32) {
    %c0_i32 = arith.constant 0 : i32
    %c0_i32_0 = arith.constant 0 : i32
    %c0_i32_1 = arith.constant 0 : i32
    return %c0_i32, %c0_i32_0 : i32, i32
  }
  func.func @transform_3(%arg0: i32) -> (i32, i32) {
    %c0_i32 = arith.constant 0 : i32
    %c0_i32_0 = arith.constant 0 : i32
    %c0_i32_1 = arith.constant 0 : i32
    return %c0_i32, %c0_i32_0 : i32, i32
  }
  func.func @transform_4(%arg0: i32) -> (i32, i32) {
    %c0_i32 = arith.constant 0 : i32
    %c0_i32_0 = arith.constant 0 : i32
    return %arg0, %c0_i32 : i32, i32
  }
}

</mosaic_0001>

<llo_original>
// kernel: tpu_custom_call.1
$region0: #{tpu_custom_call.1}
  #allocation0 [shape = 'u32[]', space=smem, size = 0x4, offset = 0x4, fixed_abs, tag = 'smem constant byte address 0x4 - core index']
  #allocation1 [shape = 'u32[72,128]{1,0:T(1,128)}', space=vmem, size = 0x9000, scoped, tag = 'internal scratch']
  %s0 = inlined_call_operand.hbm [shape: f32[8,128], index: 0, kind: input, shape index: {}]
  %s1 = inlined_call_operand.hbm [shape: f32[8,128], index: 1, kind: input, shape index: {}]
  %s2 = inlined_call_operand.hbm [shape: bf16[128,128], index: 2, kind: input, shape index: {}]
  %s3 = inlined_call_operand.hbm [shape: bf16[128,128], index: 3, kind: input, shape index: {}]
  %s4 = inlined_call_operand.hbm [shape: f32[8,128], index: 4, kind: output, shape index: {}]
  %s5 = sld [smem:[#allocation0]]
  $region42: #{tpu_custom_call.1} parent=0
    _
  %s7 = ssub.s32 1, %s5
  %s8 = scalar_select 0, %s7, %s5
  $region1: #{tpu_custom_call.1} parent=0
    #allocation2 [shape = 'u8[4096]{0}', space=vmem, size = 0x1000, scoped, tag = 'input window, operand 0, single buffered']
    #allocation3 [shape = 's32[1]{0}', space=sflag, size = 0x4, scoped, tag = 'scoped memory for tpu_custom_call.1']
    #allocation4 [shape = 's32[1]{0}', space=sflag, size = 0x4, scoped, tag = 'scoped memory for tpu_custom_call.1']
    #allocation5 [shape = 'u8[4096]{0}', space=vmem, size = 0x1000, scoped, tag = 'input window, operand 1, single buffered']
    #allocation6 [shape = 's32[1]{0}', space=sflag, size = 0x4, scoped, tag = 'scoped memory for tpu_custom_call.1']
    #allocation7 [shape = 'u8[32768]{0}', space=vmem, size = 0x8000, scoped, tag = 'input window, operand 2, single buffered']
    #allocation8 [shape = 'u8[32768]{0}', space=vmem, size = 0x8000, scoped, tag = 'input window, operand 3, single buffered']
    #allocation9 [shape = 's32[1]{0}', space=sflag, size = 0x4, scoped, tag = 'scoped memory for tpu_custom_call.1']
    #allocation10 [shape = 'u8[4096]{0}', space=vmem, size = 0x1000, scoped, tag = 'output window, operand 0, single buffered']
    %9 = vsyncpa [#allocation3], 0
    %10 = vsyncpa [#allocation6], 0
    %11 = vsyncpa [#allocation9], 0
    %12 = vsyncpa [#allocation4], 0
    // Predicated region
    $region2: #{tpu_custom_call.1} parent=1 // pred_check
      _
    $region3: #{tpu_custom_call.1} parent=1 // pred_check_branch
      %14 = sbr.rel (0) target = $region5
    $region4: #{tpu_custom_call.1} parent=1 // pred_region
      %16 = vsyncadd [#allocation3], 0
      %s18 = sshll.u32 %s0, 4
      %s19 = int_to_ptr.hbm [resolvable:$true] %s18
      %s20 = sshll.u32 [#allocation2], 4
      %s21 = int_to_ptr.vmem [resolvable:$true] %s20
      %23 = dma.hbm_to_vmem [thread:$0]  %s19, 128, %s21, [#allocation3]
    $region5: #{tpu_custom_call.1} parent=1 // pred_fallthru
      _
    // Predicated region
    $region6: #{tpu_custom_call.1} parent=1 // pred_check
      _
    $region7: #{tpu_custom_call.1} parent=1 // pred_check_branch
      %25 = sbr.rel (0) target = $region9
    $region8: #{tpu_custom_call.1} parent=1 // pred_region
      %27 = vsyncadd [#allocation6], 0
      %s29 = sshll.u32 %s1, 4
      %s30 = int_to_ptr.hbm [resolvable:$true] %s29
      %s31 = sshll.u32 [#allocation5], 4
      %s32 = int_to_ptr.vmem [resolvable:$true] %s31
      %34 = dma.hbm_to_vmem [thread:$0]  %s30, 128, %s32, [#allocation6]
    $region9: #{tpu_custom_call.1} parent=1 // pred_fallthru
      _
    // Predicated region
    $region10: #{tpu_custom_call.1} parent=1 // pred_check
      _
    $region11: #{tpu_custom_call.1} parent=1 // pred_check_branch
      %36 = sbr.rel (0) target = $region13
    $region12: #{tpu_custom_call.1} parent=1 // pred_region
      %38 = vsyncadd [#allocation6], 0
      %s39 = sshll.u32 %s2, 4
      %s40 = int_to_ptr.hbm [resolvable:$true] %s39
      %s41 = sshll.u32 [#allocation7], 4
      %s42 = int_to_ptr.vmem [resolvable:$true] %s41
      %47 = dma.hbm_to_vmem [thread:$0]  %s40, 1024, %s42, [#allocation6], 64, 64, 4
    $region13: #{tpu_custom_call.1} parent=1 // pred_fallthru
      _
    // Predicated region
    $region14: #{tpu_custom_call.1} parent=1 // pred_check
      _
    $region15: #{tpu_custom_call.1} parent=1 // pred_check_branch
      %49 = sbr.rel (0) target = $region17
    $region16: #{tpu_custom_call.1} parent=1 // pred_region
      %51 = vsyncadd [#allocation9], 0
      %s52 = sshll.u32 %s3, 4
      %s53 = int_to_ptr.hbm [resolvable:$true] %s52
      %s54 = sshll.u32 [#allocation8], 4
      %s55 = int_to_ptr.vmem [resolvable:$true] %s54
      %60 = dma.hbm_to_vmem [thread:$0]  %s53, 1024, %s55, [#allocation9], 64, 64, 4
    $region17: #{tpu_custom_call.1} parent=1 // pred_fallthru
      _
    // Predicated region
    $region18: #{tpu_custom_call.1} parent=1 // pred_check
      _
    $region19: #{tpu_custom_call.1} parent=1 // pred_check_branch
      %62 = sbr.rel (0) target = $region21
    $region20: #{tpu_custom_call.1} parent=1 // pred_region
      %64 = dma.done [#allocation3], 128
    $region21: #{tpu_custom_call.1} parent=1 // pred_fallthru
      _
    // Predicated region
    $region22: #{tpu_custom_call.1} parent=1 // pred_check
      _
    $region23: #{tpu_custom_call.1} parent=1 // pred_check_branch
      %66 = sbr.rel (0) target = $region25
    $region24: #{tpu_custom_call.1} parent=1 // pred_region
      %68 = dma.done [#allocation6], 128
    $region25: #{tpu_custom_call.1} parent=1 // pred_fallthru
      _
    // Predicated region
    $region26: #{tpu_custom_call.1} parent=1 // pred_check
      _
    $region27: #{tpu_custom_call.1} parent=1 // pred_check_branch
      %70 = sbr.rel (0) target = $region29
    $region28: #{tpu_custom_call.1} parent=1 // pred_region
      %72 = dma.done [#allocation6], 1024
    $region29: #{tpu_custom_call.1} parent=1 // pred_fallthru
      _
    // Predicated region
    $region30: #{tpu_custom_call.1} parent=1 // pred_check
      _
    $region31: #{tpu_custom_call.1} parent=1 // pred_check_branch
      %74 = sbr.rel (0) target = $region33
    $region32: #{tpu_custom_call.1} parent=1 // pred_region
      %76 = dma.done [#allocation9], 1024
    $region33: #{tpu_custom_call.1} parent=1 // pred_fallthru
      _
    %v77 = vld [vmem:[#allocation5] sm:$0x1]
    %v78 = vld [vmem:[#allocation5 + $0x1] sm:$0x1]
    %v79 = vld [vmem:[#allocation5 + $0x2] sm:$0x1]
    %v80 = vld [vmem:[#allocation5 + $0x3] sm:$0x1]
    %v81 = vld [vmem:[#allocation5 + $0x4] sm:$0x1]
    %v82 = vld [vmem:[#allocation2] sm:$0xff]
    %v83 = vperm.slane %v77, 0
    %v84 = vmul.f32 %v82, %v83
    %v85 = vperm.slane %v78, 0
    %v86 = vadd.f32 %v84, %v85
    %v87 = vmax.f32 %v86, 0.0
    %v88 = vpack.c.bf16 %v87, %v87
    %v89 = vld [vmem:[#allocation7] sm:$0xf]
    %v90 = vld [vmem:[#allocation7 + $0x4] sm:$0xf]
    %v91 = vld [vmem:[#allocation7 + $0x8] sm:$0xf]
    %v92 = vld [vmem:[#allocation7 + $0xc] sm:$0xf]
    %v93 = vld [vmem:[#allocation7 + $0x10] sm:$0xf]
    %v94 = vld [vmem:[#allocation7 + $0x14] sm:$0xf]
    %v95 = vld [vmem:[#allocation7 + $0x18] sm:$0xf]
    %v96 = vld [vmem:[#allocation7 + $0x1c] sm:$0xf]
    %v97 = vld [vmem:[#allocation7 + $0x20] sm:$0xf]
    %v98 = vld [vmem:[#allocation7 + $0x24] sm:$0xf]
    %v99 = vld [vmem:[#allocation7 + $0x28] sm:$0xf]
    %v100 = vld [vmem:[#allocation7 + $0x2c] sm:$0xf]
    %v101 = vld [vmem:[#allocation7 + $0x30] sm:$0xf]
    %v102 = vld [vmem:[#allocation7 + $0x34] sm:$0xf]
    %v103 = vld [vmem:[#allocation7 + $0x38] sm:$0xf]
    %v104 = vld [vmem:[#allocation7 + $0x3c] sm:$0xf]
    %v121 = vunpack.c.l.b16 %v89
    %v122 = vunpack.c.l.b16 %v90
    %v123 = vunpack.c.l.b16 %v91
    %v124 = vunpack.c.l.b16 %v92
    %v125 = vunpack.c.l.b16 %v93
    %v126 = vunpack.c.l.b16 %v94
    %v127 = vunpack.c.l.b16 %v95
    %v128 = vunpack.c.l.b16 %v96
    %v129 = vunpack.c.l.b16 %v97
    %v130 = vunpack.c.l.b16 %v98
    %v131 = vunpack.c.l.b16 %v99
    %v132 = vunpack.c.l.b16 %v100
    %v133 = vunpack.c.l.b16 %v101
    %v134 = vunpack.c.l.b16 %v102
    %v135 = vunpack.c.l.b16 %v103
    %v136 = vunpack.c.l.b16 %v104
    %v137 = vpack.c.b16 %v122, %v121
    %v138 = vpack.c.b16 %v124, %v123
    %v139 = vpack.c.b16 %v126, %v125
    %v140 = vpack.c.b16 %v128, %v127
    %v141 = vpack.c.b16 %v130, %v129
    %v142 = vpack.c.b16 %v132, %v131
    %v143 = vpack.c.b16 %v134, %v133
    %v144 = vpack.c.b16 %v136, %v135
    %153 = vmatpush.bf16.msra.mxu0 %v144
    %154 = vmatpush.bf16.msra.mxu0 %v143
    %155 = vmatpush.bf16.msra.mxu0 %v142
    %156 = vmatpush.bf16.msra.mxu0 %v141
    %157 = vmatpush.bf16.msra.mxu0 %v140
    %158 = vmatpush.bf16.msra.mxu0 %v139
    %159 = vmatpush.bf16.msra.mxu0 %v138
    %160 = vmatpush.bf16.msra.mxu0 %v137
    %161 = vmatmul.bf16.gmra.mxu0 %v88
    %v162 = vpop.f32.mrf.mxu0
    %v163 = vadd.f32 0.0, %v162
    %v164 = vpop.f32.mrf.mxu0
    %165 = vdwg.mxu0
    %v166 = vperm.slane %v79, 0
    %v167 = vmul.f32 %v163, %v166
    %v168 = vperm.slane %v80, 0
    %v169 = vadd.f32 %v167, %v168
    %v170 = vmax.f32 %v169, 0.0
    %v171 = vpack.c.bf16 %v170, %v170
    %v172 = vld [vmem:[#allocation8] sm:$0xf]
    %v173 = vld [vmem:[#allocation8 + $0x4] sm:$0xf]
    %v174 = vld [vmem:[#allocation8 + $0x8] sm:$0xf]
    %v175 = vld [vmem:[#allocation8 + $0xc] sm:$0xf]
    %v176 = vld [vmem:[#allocation8 + $0x10] sm:$0xf]
    %v177 = vld [vmem:[#allocation8 + $0x14] sm:$0xf]
    %v178 = vld [vmem:[#allocation8 + $0x18] sm:$0xf]
    %v179 = vld [vmem:[#allocation8 + $0x1c] sm:$0xf]
    %v180 = vld [vmem:[#allocation8 + $0x20] sm:$0xf]
    %v181 = vld [vmem:[#allocation8 + $0x24] sm:$0xf]
    %v182 = vld [vmem:[#allocation8 + $0x28] sm:$0xf]
    %v183 = vld [vmem:[#allocation8 + $0x2c] sm:$0xf]
    %v184 = vld [vmem:[#allocation8 + $0x30] sm:$0xf]
    %v185 = vld [vmem:[#allocation8 + $0x34] sm:$0xf]
    %v186 = vld [vmem:[#allocation8 + $0x38] sm:$0xf]
    %v187 = vld [vmem:[#allocation8 + $0x3c] sm:$0xf]
    %v188 = vperm.slane %v81, 0
    %v205 = vunpack.c.l.b16 %v172
    %v206 = vunpack.c.l.b16 %v173
    %v207 = vunpack.c.l.b16 %v174
    %v208 = vunpack.c.l.b16 %v175
    %v209 = vunpack.c.l.b16 %v176
    %v210 = vunpack.c.l.b16 %v177
    %v211 = vunpack.c.l.b16 %v178
    %v212 = vunpack.c.l.b16 %v179
    %v213 = vunpack.c.l.b16 %v180
    %v214 = vunpack.c.l.b16 %v181
    %v215 = vunpack.c.l.b16 %v182
    %v216 = vunpack.c.l.b16 %v183
    %v217 = vunpack.c.l.b16 %v184
    %v218 = vunpack.c.l.b16 %v185
    %v219 = vunpack.c.l.b16 %v186
    %v220 = vunpack.c.l.b16 %v187
    %v221 = vpack.c.b16 %v206, %v205
    %v222 = vpack.c.b16 %v208, %v207
    %v223 = vpack.c.b16 %v210, %v209
    %v224 = vpack.c.b16 %v212, %v211
    %v225 = vpack.c.b16 %v214, %v213
    %v226 = vpack.c.b16 %v216, %v215
    %v227 = vpack.c.b16 %v218, %v217
    %v228 = vpack.c.b16 %v220, %v219
    %237 = vmatpush.bf16.msra.mxu0 %v228
    %238 = vmatpush.bf16.msra.mxu0 %v227
    %239 = vmatpush.bf16.msra.mxu0 %v226
    %240 = vmatpush.bf16.msra.mxu0 %v225
    %241 = vmatpush.bf16.msra.mxu0 %v224
    %242 = vmatpush.bf16.msra.mxu0 %v223
    %243 = vmatpush.bf16.msra.mxu0 %v222
    %244 = vmatpush.bf16.msra.mxu0 %v221
    %245 = vmatmul.bf16.gmra.mxu0 %v171
    %v246 = vpop.f32.mrf.mxu0
    %v247 = vadd.f32 %v188, %v246
    %v248 = vpop.f32.mrf.mxu0
    %249 = vdwg.mxu0
    %v250 = vadd.f32 %v247, %v82
    %251 = vst [vmem:[#allocation10] sm:$0xff] %v250
    // Predicated region
    $region34: #{tpu_custom_call.1} parent=1 // pred_check
      _
    $region35: #{tpu_custom_call.1} parent=1 // pred_check_branch
      %253 = sbr.rel (0) target = $region37
    $region36: #{tpu_custom_call.1} parent=1 // pred_region
      %255 = vsyncadd [#allocation4], 0
      %s257 = sshll.u32 [#allocation10], 4
      %s258 = int_to_ptr.vmem [resolvable:$true] %s257
      %s259 = sshll.u32 %s4, 4
      %s260 = int_to_ptr.hbm [resolvable:$true] %s259
      %262 = dma.vmem_to_hbm [thread:$0]  %s258, 128, %s260, [#allocation4]
    $region37: #{tpu_custom_call.1} parent=1 // pred_fallthru
      _
    // Predicated region
    $region38: #{tpu_custom_call.1} parent=1 // pred_check
      _
    $region39: #{tpu_custom_call.1} parent=1 // pred_check_branch
      %264 = sbr.rel (0) target = $region41
    $region40: #{tpu_custom_call.1} parent=1 // pred_region
      %266 = dma.done [#allocation4], 128
    $region41: #{tpu_custom_call.1} parent=1 // pred_fallthru
      _
    %267 = vsyncpa [#allocation3], 1
    %268 = vsyncpa [#allocation6], 1
    %269 = vsyncpa [#allocation9], 1
    %270 = vsyncpa [#allocation4], 1

</llo_original>
